<compile_context>
chip_gen: v5e
topology: v5e:2x2
jax: 0.10.0
libtpu: 0.0.40
codegen_flags: <defaults>
</compile_context>

<pallas_src>
import functools

import jax
import jax.numpy as jnp
from jax.experimental import pallas as pl
from jax.experimental.pallas import tpu as pltpu

LANES = 128


def mysequential_kernel(x_ref, w1_ref, b1_ref, w2_ref, b2_ref, o_ref):
    """Fused Linear -> ReLU -> Linear on one (TB, d_in) batch tile.

    x_ref : (TB, d_in)      f32/bf16 (cast to bf16 for the MXU)
    w1_ref: (d_in, d_hid)   bf16  (pre-transposed: in x out, VMEM-resident)
    b1_ref: (1, d_hid)      f32
    w2_ref: (d_hid, n_out)  bf16  (pre-transposed; n_out = d_out or 128-padded)
    b2_ref: (1, n_out)      f32
    o_ref : (TB, n_out)     f32
    """
    x = x_ref[...].astype(jnp.bfloat16)       # full-rate bf16 MXU on v5e/v6e/v7x
    # Layer 0: Linear(d_in, d_hid) on the MXU, f32 accumulation.
    h = jnp.dot(x, w1_ref[...], preferred_element_type=jnp.float32)
    # Layer 1: bias + ReLU epilogue kept in f32 (v5e VPU has no bf16).
    h = jnp.maximum(h + b1_ref[...], 0.0)
    # Layer 2: Linear(d_hid, n_out), bf16 operands, f32 accumulation.
    y = jnp.dot(h.astype(jnp.bfloat16), w2_ref[...],
                preferred_element_type=jnp.float32) + b2_ref[...]
    o_ref[...] = y.astype(o_ref.dtype)


def prepare_params(w1, b1, w2, b2, *, pad_output=False):
    """One-time conversion of PyTorch-layout params to kernel layout.

    Call ONCE at init, never per forward.  PyTorch layout: w1=(d_hid,d_in),
    w2=(d_out,d_hid).  Returns ((w1_t, b1_2d, w2_t, b2_2d), d_out).

    pad_output=False (default): w2_t is (d_hid, d_out) -> kernel emits the
      narrow (B, d_out) output directly (no padded writeback, no un-pad slice).
    pad_output=True: w2_t/b2 are zero-padded up to the next multiple of 128
      lanes -> lane-dense (unmasked) output stores; the consumer is expected to
      fold the un-pad into its own weights (padded columns are exact zeros).
    """
    d_hid, d_in = w1.shape
    d_out, _ = w2.shape
    w1_t = jnp.asarray(w1, jnp.float32).T.astype(jnp.bfloat16)    # (d_in, d_hid)
    b1_2d = jnp.asarray(b1, jnp.float32).reshape(1, d_hid)        # (1, d_hid) f32
    w2_t = jnp.asarray(w2, jnp.float32).T.astype(jnp.bfloat16)    # (d_hid, d_out)
    b2_2d = jnp.asarray(b2, jnp.float32).reshape(1, d_out)        # (1, d_out) f32
    if pad_output:
        n_pad = ((d_out + LANES - 1) // LANES) * LANES            # round up to 128
        w2_t = jnp.zeros((d_hid, n_pad), jnp.bfloat16).at[:, :d_out].set(w2_t)
        b2_2d = jnp.zeros((1, n_pad), jnp.float32).at[0, :d_out].set(
            jnp.asarray(b2, jnp.float32))
    return (w1_t, b1_2d, w2_t, b2_2d), int(d_out)


@functools.partial(jax.jit, static_argnames=("tb", "min_pallas_batch"))
def mysequential_forward(x, w1_t, b1_2d, w2_t, b2_2d, *, tb=2048,
                         min_pallas_batch=64):
    """Fused MySequential forward. x: (B, d_in); params from prepare_params."""
    B, d_in = x.shape
    d_hid = w1_t.shape[1]
    n_out = w2_t.shape[1]          # d_out (narrow) or 128-padded

    if B < min_pallas_batch:
        # Tiny batch: one grid step is pure pallas_call launch/pipeline
        # overhead; XLA's fused dot+relu+dot is at least as fast and avoids it.
        h = jnp.maximum(
            jnp.dot(x.astype(jnp.bfloat16), w1_t,
                    preferred_element_type=jnp.float32) + b1_2d, 0.0)
        return jnp.dot(h.astype(jnp.bfloat16), w2_t,
                       preferred_element_type=jnp.float32) + b2_2d

    # Batch tile: large (1-4K rows, ~0.35us/step overhead vs only ~100-600B of
    # streamed traffic per row), rounded to 8 sublanes, and capped so the grid
    # has >= 2 steps (v7x has 2 TensorCores; a 1-step grid idles one).
    tb = min(tb, B)
    if B >= 16:
        half = -(-B // 2)                 # cdiv(B, 2)
        half = -(-half // 8) * 8          # round up to a multiple of 8
        tb = min(tb, half)
        tb = max(8, (tb // 8) * 8)
    else:
        tb = B                            # whole-batch tile (== full dim is legal)
    grid = (pl.cdiv(B, tb),)

    flops = 2 * B * (d_in * d_hid + d_hid * n_out)
    bytes_accessed = (B * d_in * x.dtype.itemsize            # streamed x
                      + 2 * (d_in * d_hid + d_hid * n_out)   # bf16 weights
                      + 4 * (d_hid + n_out)                  # f32 biases
                      + 4 * B * n_out)                       # f32 output

    return pl.pallas_call(
        mysequential_kernel,
        out_shape=jax.ShapeDtypeStruct((B, n_out), jnp.float32),
        grid=grid,
        in_specs=[
            pl.BlockSpec((tb, d_in), lambda i: (i, 0)),       # x: streamed per tile
            pl.BlockSpec((d_in, d_hid), lambda i: (0, 0)),    # w1: VMEM-resident
            pl.BlockSpec((1, d_hid), lambda i: (0, 0)),       # b1: VMEM-resident
            pl.BlockSpec((d_hid, n_out), lambda i: (0, 0)),   # w2: VMEM-resident
            pl.BlockSpec((1, n_out), lambda i: (0, 0)),       # b2: VMEM-resident
        ],
        out_specs=pl.BlockSpec((tb, n_out), lambda i: (i, 0)),
        compiler_params=pltpu.CompilerParams(
            dimension_semantics=("parallel",),   # shard batch across TCs
        ),
        cost_estimate=pl.CostEstimate(
            flops=flops, transcendentals=0, bytes_accessed=bytes_accessed),
    )(x, w1_t, b1_2d, w2_t, b2_2d)


def _init_linear(key, out_features, in_features):
    """Deterministic init mimicking nn.Linear default (uniform +-1/sqrt(fan_in))."""
    kw, kb = jax.random.split(key)
    bound = 1.0 / jnp.sqrt(float(in_features))
    w = jax.random.uniform(kw, (out_features, in_features), jnp.float32, -bound, bound)
    b = jax.random.uniform(kb, (out_features,), jnp.float32, -bound, bound)
    return w, b


if __name__ == "__main__":
    key = jax.random.PRNGKey(0)
    kx, k1, k2, kx2 = jax.random.split(key, 4)

    B, D_IN, D_HID, D_OUT = 512, 20, 256, 10

    x = jax.random.normal(kx, (B, D_IN), jnp.float32)
    w1, b1 = _init_linear(k1, D_HID, D_IN)    # nn.Linear(20, 256)
    w2, b2 = _init_linear(k2, D_OUT, D_HID)   # nn.Linear(256, 10)

    # ---- Narrow-output path (default): (B, d_out), no padded writeback/slice ----
    params, d_out = prepare_params(w1, b1, w2, b2)
    out = jax.block_until_ready(mysequential_forward(x, *params))
    assert out.shape == (B, D_OUT)

    # References: bf16-matched arithmetic (tight) and pure-f32 PyTorch semantics (loose).
    w1_t, b1_2d, w2_t, b2_2d = params
    h_ref = jnp.maximum(jnp.dot(x.astype(jnp.bfloat16), w1_t,
                                preferred_element_type=jnp.float32) + b1_2d, 0.0)
    ref_bf16 = jnp.dot(h_ref.astype(jnp.bfloat16), w2_t,
                       preferred_element_type=jnp.float32) + b2_2d
    ref_f32 = jnp.maximum(x @ w1.T + b1, 0.0) @ w2.T + b2
    assert jnp.allclose(out, ref_bf16, atol=1e-2, rtol=1e-2)
    assert jnp.allclose(out, ref_f32, atol=5e-2, rtol=5e-2)

    # ---- Padded-output path: lane-dense (B, 128) store; padded lanes are zeros ----
    params_pad, _ = prepare_params(w1, b1, w2, b2, pad_output=True)
    out_pad = jax.block_until_ready(mysequential_forward(x, *params_pad))
    assert out_pad.shape == (B, LANES)
    assert jnp.allclose(out_pad[:, :D_OUT], out, atol=1e-3, rtol=1e-3)
    assert jnp.allclose(out_pad[:, D_OUT:], 0.0)

    # ---- Tiny batch routes through plain XLA (pallas launch overhead dominates) ----
    x_small = jax.random.normal(kx2, (8, D_IN), jnp.float32)
    out_small = jax.block_until_ready(mysequential_forward(x_small, *params))
    ref_small = jnp.maximum(x_small @ w1.T + b1, 0.0) @ w2.T + b2
    assert out_small.shape == (8, D_OUT)
    assert jnp.allclose(out_small, ref_small, atol=5e-2, rtol=5e-2)

    print("KERNEL_OK")
</pallas_src>

<mosaic_0001>
module attributes {stable_mosaic.version = 11 : i64} {
  func.func @mysequential_kernel(%arg0: i32, %arg1: memref<256x20xf32, #tpu.memory_space<vmem>>, %arg2: memref<20x256xbf16, #tpu.memory_space<vmem>>, %arg3: memref<1x256xf32, #tpu.memory_space<vmem>>, %arg4: memref<256x10xbf16, #tpu.memory_space<vmem>>, %arg5: memref<1x10xf32, #tpu.memory_space<vmem>>, %arg6: memref<256x10xf32, #tpu.memory_space<vmem>>) attributes {dimension_semantics = [#tpu.dimension_semantics<parallel>], iteration_bounds = array<i64: 2>, scalar_prefetch = 0 : i64, scratch_operands = 0 : i64, tpu.core_type = #tpu.core_type<tc>, window_params = [{transform_indices = @transform_0, window_bounds = array<i64: 256, 20>}, {pipeline_mode = #tpu.pipeline_mode<synchronous>, transform_indices = @transform_1, window_bounds = array<i64: 20, 256>}, {pipeline_mode = #tpu.pipeline_mode<synchronous>, transform_indices = @transform_2, window_bounds = array<i64: 1, 256>}, {pipeline_mode = #tpu.pipeline_mode<synchronous>, transform_indices = @transform_3, window_bounds = array<i64: 256, 10>}, {pipeline_mode = #tpu.pipeline_mode<synchronous>, transform_indices = @transform_4, window_bounds = array<i64: 1, 10>}, {transform_indices = @transform_5, window_bounds = array<i64: 256, 10>}]} {
    %c0 = arith.constant 0 : index
    %c0_0 = arith.constant 0 : index
    %0 = vector.load %arg1[%c0, %c0_0] : memref<256x20xf32, #tpu.memory_space<vmem>>, vector<256x20xf32>
    %1 = arith.truncf %0 : vector<256x20xf32> to vector<256x20xbf16>
    %c0_1 = arith.constant 0 : index
    %c0_2 = arith.constant 0 : index
    %2 = vector.load %arg2[%c0_1, %c0_2] : memref<20x256xbf16, #tpu.memory_space<vmem>>, vector<20x256xbf16>
    %cst = arith.constant dense<0.000000e+00> : vector<256x256xf32>
    %3 = tpu.matmul %1, %2, %cst {dimension_numbers = #tpu.dot_dimension_numbers<[1], [0], [0], [1], [0, 0, 1, 1], [], []>} : vector<256x20xbf16>, vector<20x256xbf16>, vector<256x256xf32> -> vector<256x256xf32>
    %c0_3 = arith.constant 0 : index
    %c0_4 = arith.constant 0 : index
    %4 = vector.load %arg3[%c0_3, %c0_4] : memref<1x256xf32, #tpu.memory_space<vmem>>, vector<1x256xf32>
    %5 = vector.broadcast %4 : vector<1x256xf32> to vector<256x256xf32>
    %6 = arith.addf %3, %5 : vector<256x256xf32>
    %cst_5 = arith.constant 0.000000e+00 : f32
    %7 = vector.broadcast %cst_5 : f32 to vector<256x256xf32>
    %8 = arith.maximumf %6, %7 : vector<256x256xf32>
    %9 = arith.truncf %8 : vector<256x256xf32> to vector<256x256xbf16>
    %c0_6 = arith.constant 0 : index
    %c0_7 = arith.constant 0 : index
    %10 = vector.load %arg4[%c0_6, %c0_7] : memref<256x10xbf16, #tpu.memory_space<vmem>>, vector<256x10xbf16>
    %cst_8 = arith.constant dense<0.000000e+00> : vector<256x10xf32>
    %11 = tpu.matmul %9, %10, %cst_8 {dimension_numbers = #tpu.dot_dimension_numbers<[1], [0], [0], [1], [0, 0, 1, 1], [], []>} : vector<256x256xbf16>, vector<256x10xbf16>, vector<256x10xf32> -> vector<256x10xf32>
    %c0_9 = arith.constant 0 : index
    %c0_10 = arith.constant 0 : index
    %12 = vector.load %arg5[%c0_9, %c0_10] : memref<1x10xf32, #tpu.memory_space<vmem>>, vector<1x10xf32>
    %13 = vector.broadcast %12 : vector<1x10xf32> to vector<256x10xf32>
    %14 = arith.addf %11, %13 : vector<256x10xf32>
    %c0_11 = arith.constant 0 : index
    %c0_12 = arith.constant 0 : index
    %15 = vector.load %arg6[%c0_11, %c0_12] : memref<256x10xf32, #tpu.memory_space<vmem>>, vector<256x10xf32>
    tpu.vector_store %arg6[%c0_11, %c0_12], %14 {strides = array<i32>} : memref<256x10xf32, #tpu.memory_space<vmem>>, vector<256x10xf32>,
    return
  }
  func.func @transform_0(%arg0: i32) -> (i32, i32) {
    %c0_i32 = arith.constant 0 : i32
    %c0_i32_0 = arith.constant 0 : i32
    return %arg0, %c0_i32 : i32, i32
  }
  func.func @transform_1(%arg0: i32) -> (i32, i32) {
    %c0_i32 = arith.constant 0 : i32
    %c0_i32_0 = arith.constant 0 : i32
    %c0_i32_1 = arith.constant 0 : i32
    return %c0_i32, %c0_i32_0 : i32, i32
  }
  func.func @transform_2(%arg0: i32) -> (i32, i32) {
    %c0_i32 = arith.constant 0 : i32
    %c0_i32_0 = arith.constant 0 : i32
    %c0_i32_1 = arith.constant 0 : i32
    return %c0_i32, %c0_i32_0 : i32, i32
  }
  func.func @transform_3(%arg0: i32) -> (i32, i32) {
    %c0_i32 = arith.constant 0 : i32
    %c0_i32_0 = arith.constant 0 : i32
    %c0_i32_1 = arith.constant 0 : i32
    return %c0_i32, %c0_i32_0 : i32, i32
  }
  func.func @transform_4(%arg0: i32) -> (i32, i32) {
    %c0_i32 = arith.constant 0 : i32
    %c0_i32_0 = arith.constant 0 : i32
    %c0_i32_1 = arith.constant 0 : i32
    return %c0_i32, %c0_i32_0 : i32, i32
  }
  func.func @transform_5(%arg0: i32) -> (i32, i32) {
    %c0_i32 = arith.constant 0 : i32
    %c0_i32_0 = arith.constant 0 : i32
    return %arg0, %c0_i32 : i32, i32
  }
}

</mosaic_0001>

<llo_original>
// kernel: mysequential_forward.1
$region0: #{mysequential_forward.1}
  #allocation0 [shape = 'u32[]', space=smem, size = 0x4, offset = 0x4, fixed_abs, tag = 'smem constant byte address 0x4 - core index']
  #allocation1 [shape = 'u32[72,128]{1,0:T(1,128)}', space=vmem, size = 0x9000, scoped, tag = 'internal scratch']
  %s0 = inlined_call_operand.vmem [shape: f32[512,20], index: 0, kind: input, shape index: {}]
  %s1 = inlined_call_operand.vmem [shape: bf16[20,256], index: 1, kind: input, shape index: {}]
  %s2 = inlined_call_operand.vmem [shape: f32[1,256], index: 2, kind: input, shape index: {}]
  %s3 = inlined_call_operand.vmem [shape: bf16[256,10], index: 3, kind: input, shape index: {}]
  %s4 = inlined_call_operand.vmem [shape: f32[1,10], index: 4, kind: input, shape index: {}]
  %s5 = inlined_call_operand.vmem [shape: f32[512,10], index: 5, kind: output, shape index: {}]
  %s6 = sld [smem:[#allocation0]]
  $region53: #{mysequential_forward.1} parent=0
    _
  %s8 = ssub.s32 1, %s6
  %s9 = scalar_select 0, %s8, %s6
  loop: start=0, step=1, limit=4
  $region2: #{mysequential_forward.1} parent=0 // loop_pre_header
    _
  $region3: #{mysequential_forward.1} parent=0 // loop_header
    %s11 = sphi 0, %s15
    %p12 = scmp.ge.s32.totalorder %s11, 4
    %s21 = sphi 0, %s23
    %s24 = sphi 0, %s21
    %s25 = sphi 0, %s24
    %s41 = sphi 0, %s25
    %s45 = sphi 0, %s45
    %s47 = sphi 0, %s45
    %s48 = sphi 0, %s47
    %s62 = sphi 0, %s48
    %s66 = sphi 0, %s66
    %s68 = sphi 0, %s66
    %s69 = sphi 0, %s68
    %s83 = sphi 0, %s69
    %s87 = sphi 0, %s87
    %s89 = sphi 0, %s87
    %s90 = sphi 0, %s89
    %s104 = sphi 0, %s90
    %s108 = sphi 0, %s108
    %s110 = sphi 0, %s108
    %s111 = sphi 0, %s110
    %s125 = sphi 0, %s111
    %s131 = sphi 0, %s133
    %s134 = sphi 0, %s131
    %s135 = sphi 0, %s134
    %s151 = sphi 0, %s135
  $region4: #{mysequential_forward.1} parent=0 // loop_header_branch
    %14 = sbr.rel (%p12) target = $region8
  $region5: #{mysequential_forward.1} parent=0 // loop_body
    %s16 = ssub.s32 %s11, 1
    %s17 = ssub.s32 %s11, 2
    %s18 = sadd.s32 %s11, 1
    %s19 = ssub.s32 %s11, %s18
    %p20 = scmp.eq.s32.totalorder %s19, 0
    %s22 = sadd.s32 %s21, 1
    %s23 = scalar_select %p20, %s21, %s22
    %p26 = pneg %p20
    %p27 = scmp.eq.s32.totalorder %s11, 1
    %p28 = por %p26, %p27
    %p29 = scmp.ne.s32.totalorder %s21, %s24
    %p30 = scmp.eq.s32.totalorder %s11, 0
    %p31 = por %p29, %p30
    %p32 = scmp.ne.s32.totalorder %s21, %s24
    %p33 = scmp.eq.s32.totalorder %s16, 1
    %p34 = por %p32, %p33
    %p35 = scmp.ne.s32.totalorder %s24, %s25
    %p36 = scmp.eq.s32.totalorder %s16, 0
    %p37 = por %p35, %p36
    %p38 = scmp.ne.s32.totalorder %s24, %s25
    %p39 = scmp.eq.s32.totalorder %s17, 1
    %p40 = por %p38, %p39
    %p42 = scmp.ne.s32.totalorder %s25, %s41
    %p43 = scmp.eq.s32.totalorder %s17, 0
    %p44 = por %p42, %p43
    %s46 = sadd.s32 %s45, 1
    %p49 = scmp.eq.s32.totalorder %s11, 1
    %p50 = scmp.ne.s32.totalorder %s45, %s47
    %p51 = scmp.eq.s32.totalorder %s11, 0
    %p52 = por %p50, %p51
    %p53 = scmp.ne.s32.totalorder %s45, %s47
    %p54 = scmp.eq.s32.totalorder %s16, 1
    %p55 = por %p53, %p54
    %p56 = scmp.ne.s32.totalorder %s47, %s48
    %p57 = scmp.eq.s32.totalorder %s16, 0
    %p58 = por %p56, %p57
    %p59 = scmp.ne.s32.totalorder %s47, %s48
    %p60 = scmp.eq.s32.totalorder %s17, 1
    %p61 = por %p59, %p60
    %p63 = scmp.ne.s32.totalorder %s48, %s62
    %p64 = scmp.eq.s32.totalorder %s17, 0
    %p65 = por %p63, %p64
    %s67 = sadd.s32 %s66, 1
    %p70 = scmp.eq.s32.totalorder %s11, 1
    %p71 = scmp.ne.s32.totalorder %s66, %s68
    %p72 = scmp.eq.s32.totalorder %s11, 0
    %p73 = por %p71, %p72
    %p74 = scmp.ne.s32.totalorder %s66, %s68
    %p75 = scmp.eq.s32.totalorder %s16, 1
    %p76 = por %p74, %p75
    %p77 = scmp.ne.s32.totalorder %s68, %s69
    %p78 = scmp.eq.s32.totalorder %s16, 0
    %p79 = por %p77, %p78
    %p80 = scmp.ne.s32.totalorder %s68, %s69
    %p81 = scmp.eq.s32.totalorder %s17, 1
    %p82 = por %p80, %p81
    %p84 = scmp.ne.s32.totalorder %s69, %s83
    %p85 = scmp.eq.s32.totalorder %s17, 0
    %p86 = por %p84, %p85
    %s88 = sadd.s32 %s87, 1
    %p91 = scmp.eq.s32.totalorder %s11, 1
    %p92 = scmp.ne.s32.totalorder %s87, %s89
    %p93 = scmp.eq.s32.totalorder %s11, 0
    %p94 = por %p92, %p93
    %p95 = scmp.ne.s32.totalorder %s87, %s89
    %p96 = scmp.eq.s32.totalorder %s16, 1
    %p97 = por %p95, %p96
    %p98 = scmp.ne.s32.totalorder %s89, %s90
    %p99 = scmp.eq.s32.totalorder %s16, 0
    %p100 = por %p98, %p99
    %p101 = scmp.ne.s32.totalorder %s89, %s90
    %p102 = scmp.eq.s32.totalorder %s17, 1
    %p103 = por %p101, %p102
    %p105 = scmp.ne.s32.totalorder %s90, %s104
    %p106 = scmp.eq.s32.totalorder %s17, 0
    %p107 = por %p105, %p106
    %s109 = sadd.s32 %s108, 1
    %p112 = scmp.eq.s32.totalorder %s11, 1
    %p113 = scmp.ne.s32.totalorder %s108, %s110
    %p114 = scmp.eq.s32.totalorder %s11, 0
    %p115 = por %p113, %p114
    %p116 = scmp.ne.s32.totalorder %s108, %s110
    %p117 = scmp.eq.s32.totalorder %s16, 1
    %p118 = por %p116, %p117
    %p119 = scmp.ne.s32.totalorder %s110, %s111
    %p120 = scmp.eq.s32.totalorder %s16, 0
    %p121 = por %p119, %p120
    %p122 = scmp.ne.s32.totalorder %s110, %s111
    %p123 = scmp.eq.s32.totalorder %s17, 1
    %p124 = por %p122, %p123
    %p126 = scmp.ne.s32.totalorder %s111, %s125
    %p127 = scmp.eq.s32.totalorder %s17, 0
    %p128 = por %p126, %p127
    %s129 = ssub.s32 %s11, %s18
    %p130 = scmp.eq.s32.totalorder %s129, 0
    %s132 = sadd.s32 %s131, 1
    %s133 = scalar_select %p130, %s131, %s132
    %p136 = pneg %p130
    %p137 = scmp.eq.s32.totalorder %s11, 1
    %p138 = por %p136, %p137
    %p139 = scmp.ne.s32.totalorder %s131, %s134
    %p140 = scmp.eq.s32.totalorder %s11, 0
    %p141 = por %p139, %p140
    %p142 = scmp.ne.s32.totalorder %s131, %s134
    %p143 = scmp.eq.s32.totalorder %s16, 1
    %p144 = por %p142, %p143
    %p145 = scmp.ne.s32.totalorder %s134, %s135
    %p146 = scmp.eq.s32.totalorder %s16, 0
    %p147 = por %p145, %p146
    %p148 = scmp.ne.s32.totalorder %s134, %s135
    %p149 = scmp.eq.s32.totalorder %s17, 1
    %p150 = por %p148, %p149
    %p152 = scmp.ne.s32.totalorder %s135, %s151
    %p153 = scmp.eq.s32.totalorder %s17, 0
    %p154 = por %p152, %p153
    %p155 = scmp.le.s32.totalorder 1, %s11
    %p156 = scmp.lt.s32.totalorder %s11, 3
    %p157 = pnand %p155, %p156
    %p158 = pneg %p157
    // Predicated region
    $region9: #{mysequential_forward.1} parent=5 // pred_check
      _
    $region10: #{mysequential_forward.1} parent=5 // pred_check_branch
      %160 = sbr.rel (%p157) target = $region12
    $region11: #{mysequential_forward.1} parent=5 // pred_region
      %s161 = ssub.s32 %s11, 1
      // Predicated region
      $region13: #{mysequential_forward.1} parent=11 // pred_check
        %p162 = pneg %p58
      $region14: #{mysequential_forward.1} parent=11 // pred_check_branch
        %164 = sbr.rel (%p162) target = $region16
      $region15: #{mysequential_forward.1} parent=11 // pred_region
        _
      $region16: #{mysequential_forward.1} parent=11 // pred_fallthru
        _
      // Predicated region
      $region17: #{mysequential_forward.1} parent=11 // pred_check
        %p165 = pneg %p79
      $region18: #{mysequential_forward.1} parent=11 // pred_check_branch
        %167 = sbr.rel (%p165) target = $region20
      $region19: #{mysequential_forward.1} parent=11 // pred_region
        _
      $region20: #{mysequential_forward.1} parent=11 // pred_fallthru
        _
      // Predicated region
      $region21: #{mysequential_forward.1} parent=11 // pred_check
        %p168 = pneg %p100
      $region22: #{mysequential_forward.1} parent=11 // pred_check_branch
        %170 = sbr.rel (%p168) target = $region24
      $region23: #{mysequential_forward.1} parent=11 // pred_region
        _
      $region24: #{mysequential_forward.1} parent=11 // pred_fallthru
        _
      // Predicated region
      $region25: #{mysequential_forward.1} parent=11 // pred_check
        %p171 = pneg %p121
      $region26: #{mysequential_forward.1} parent=11 // pred_check_branch
        %173 = sbr.rel (%p171) target = $region28
      $region27: #{mysequential_forward.1} parent=11 // pred_region
        _
      $region28: #{mysequential_forward.1} parent=11 // pred_fallthru
        _
    $region12: #{mysequential_forward.1} parent=5 // pred_fallthru
      _
    %p174 = scmp.lt.s32.totalorder %s11, 2
    // Predicated region
    $region29: #{mysequential_forward.1} parent=5 // pred_check
      %p175 = pneg %p174
    $region30: #{mysequential_forward.1} parent=5 // pred_check_branch
      %177 = sbr.rel (%p175) target = $region32
    $region31: #{mysequential_forward.1} parent=5 // pred_region
      // Predicated region
      $region33: #{mysequential_forward.1} parent=31 // pred_check
        %p178 = pneg %p31
      $region34: #{mysequential_forward.1} parent=31 // pred_check_branch
        %180 = sbr.rel (%p178) target = $region36
      $region35: #{mysequential_forward.1} parent=31 // pred_region
        %s181 = smul.u32 32, %s11
        %p182 = scmp.lt.s32.totalorder %s181, 63
        %s183 = scalar_select %p182, %s181, 63
        %s184 = smul.addr %s183, 8
        %s185 = scalar_lea.vmem %s0, %s184
        %s186 = smul.u32 32, %s11
      $region36: #{mysequential_forward.1} parent=31 // pred_fallthru
        _
    $region32: #{mysequential_forward.1} parent=5 // pred_fallthru
      _
    %p187 = scmp.le.s32.totalorder 1, %s11
    %p188 = scmp.lt.s32.totalorder %s11, 3
    %p189 = pnand %p187, %p188
    %p190 = pneg %p189
    // Predicated region
    $region37: #{mysequential_forward.1} parent=5 // pred_check
      _
    $region38: #{mysequential_forward.1} parent=5 // pred_check_branch
      %192 = sbr.rel (%p189) target = $region40
    $region39: #{mysequential_forward.1} parent=5 // pred_region
      %s193 = ssub.s32 %s11, 1
      %s194 = smul.u32 32, %s16
      %p195 = scmp.lt.s32.totalorder %s194, 63
      %s196 = scalar_select %p195, %s194, 63
      %s197 = smul.addr %s196, 8
      %s198 = scalar_lea.vmem %s0, %s197
      %p199 = pneg %p37
      %p200 = pneg %p34
      %p201 = pneg %p58
      %p202 = pneg %p55
      %p203 = pneg %p79
      %p204 = pneg %p76
      %p205 = pneg %p100
      %p206 = pneg %p97
      %p207 = pneg %p121
      %p208 = pneg %p118
      %p209 = pneg %p147
      %p210 = pneg %p144
      %s211 = smul.u32 32, %s16
      %p212 = scmp.lt.s32.totalorder %s211, 63
      %s213 = scalar_select %p212, %s211, 63
      %s214 = smul.addr %s213, 8
      %s215 = scalar_lea.vmem %s5, %s214
      %s216 = smul.u32 32, %s16
      %p217 = scmp.lt.s32.totalorder %s216, 63
      %s218 = scalar_select %p217, %s216, 63
      %s219 = smul.addr %s218, 8
      %s220 = scalar_lea.vmem %s0, %s219
      %s221 = smul.u32 32, %s16
      %s222 = smul.u32 32, %s16
      %p223 = scmp.lt.s32.totalorder %s222, 63
      %s224 = scalar_select %p223, %s222, 63
      %s225 = smul.addr %s224, 8
      %s226 = scalar_lea.vmem %s5, %s225
      %s227 = smul.u32 32, %s16
      %v229 = vld [vmem:[%s220] sm:$0xff]
      %v230 = vld [vmem:[%s220 + $0x8] sm:$0xff]
      %v231 = vld [vmem:[%s220 + $0x10] sm:$0xff]
      %v232 = vld [vmem:[%s220 + $0x18] sm:$0xff]
      %v233 = vld [vmem:[%s220 + $0x20] sm:$0xff]
      %v234 = vld [vmem:[%s220 + $0x28] sm:$0xff]
      %v235 = vld [vmem:[%s220 + $0x30] sm:$0xff]
      %v236 = vld [vmem:[%s220 + $0x38] sm:$0xff]
      %v237 = vld [vmem:[%s220 + $0x40] sm:$0xff]
      %v238 = vld [vmem:[%s220 + $0x48] sm:$0xff]
      %v239 = vld [vmem:[%s220 + $0x50] sm:$0xff]
      %v240 = vld [vmem:[%s220 + $0x58] sm:$0xff]
      %v241 = vld [vmem:[%s220 + $0x60] sm:$0xff]
      %v242 = vld [vmem:[%s220 + $0x68] sm:$0xff]
      %v243 = vld [vmem:[%s220 + $0x70] sm:$0xff]
      %v244 = vld [vmem:[%s220 + $0x78] sm:$0xff]
      %v245 = vld [vmem:[%s220 + $0x80] sm:$0xff]
      %v246 = vld [vmem:[%s220 + $0x88] sm:$0xff]
      %v247 = vld [vmem:[%s220 + $0x90] sm:$0xff]
      %v248 = vld [vmem:[%s220 + $0x98] sm:$0xff]
      %v249 = vld [vmem:[%s220 + $0xa0] sm:$0xff]
      %v250 = vld [vmem:[%s220 + $0xa8] sm:$0xff]
      %v251 = vld [vmem:[%s220 + $0xb0] sm:$0xff]
      %v252 = vld [vmem:[%s220 + $0xb8] sm:$0xff]
      %v253 = vld [vmem:[%s220 + $0xc0] sm:$0xff]
      %v254 = vld [vmem:[%s220 + $0xc8] sm:$0xff]
      %v255 = vld [vmem:[%s220 + $0xd0] sm:$0xff]
      %v256 = vld [vmem:[%s220 + $0xd8] sm:$0xff]
      %v257 = vld [vmem:[%s220 + $0xe0] sm:$0xff]
      %v258 = vld [vmem:[%s220 + $0xe8] sm:$0xff]
      %v259 = vld [vmem:[%s220 + $0xf0] sm:$0xff]
      %v260 = vld [vmem:[%s220 + $0xf8] sm:$0xff]
      %v261 = vpack.c.bf16 %v230, %v229
      %v262 = vpack.c.bf16 %v232, %v231
      %v263 = vpack.c.bf16 %v234, %v233
      %v264 = vpack.c.bf16 %v236, %v235
      %v265 = vpack.c.bf16 %v238, %v237
      %v266 = vpack.c.bf16 %v240, %v239
      %v267 = vpack.c.bf16 %v242, %v241
      %v268 = vpack.c.bf16 %v244, %v243
      %v269 = vpack.c.bf16 %v246, %v245
      %v270 = vpack.c.bf16 %v248, %v247
      %v271 = vpack.c.bf16 %v250, %v249
      %v272 = vpack.c.bf16 %v252, %v251
      %v273 = vpack.c.bf16 %v254, %v253
      %v274 = vpack.c.bf16 %v256, %v255
      %v275 = vpack.c.bf16 %v258, %v257
      %v276 = vpack.c.bf16 %v260, %v259
      %v277 = vld [vmem:[%s1] sm:$0xff]
      %v278 = vld [vmem:[%s1 + $0x8] sm:$0xff]
      %v279 = vld [vmem:[%s1 + $0x10] sm:$0x33]
      %v280 = vld [vmem:[%s2] sm:$0x3]
      %v282 = vperm.slane %v280, 0
      %v283 = vperm.slane %v280, 1
      %v289 = vunpack.c.l.b16 %v277
      %v290 = vunpack.c.h.b16 %v277
      %v291 = vunpack.c.l.b16 %v278
      %v292 = vunpack.c.h.b16 %v278
      %v293 = vunpack.c.l.b16 %v279
      %v294 = vunpack.c.h.b16 %v279
      %v295 = vpack.c.b16 %v291, %v289
      %v296 = vpack.c.b16 %v292, %v290
      %v297 = vpack.c.b16 %v293, %v293
      %v298 = vpack.c.b16 %v294, %v294
      %vm301 = vcmask 162816
      %v303 = vsel %vm301, %v261, 0
      %v306 = vsel %vm301, %v262, 0
      %v309 = vsel %vm301, %v263, 0
      %v312 = vsel %vm301, %v264, 0
      %v315 = vsel %vm301, %v265, 0
      %v318 = vsel %vm301, %v266, 0
      %v321 = vsel %vm301, %v267, 0
      %v324 = vsel %vm301, %v268, 0
      %v327 = vsel %vm301, %v269, 0
      %v330 = vsel %vm301, %v270, 0
      %v333 = vsel %vm301, %v271, 0
      %v336 = vsel %vm301, %v272, 0
      %v339 = vsel %vm301, %v273, 0
      %v342 = vsel %vm301, %v274, 0
      %v345 = vsel %vm301, %v275, 0
      %v348 = vsel %vm301, %v276, 0
      %vm350 = vcmask 1041408
      %v352 = vsel %vm350, %v297, 0
      %v355 = vsel %vm350, %v298, 0
      %357 = vmatpush.bf16.msra.mxu0 0
      %358 = vmatpush.bf16.msra.mxu0 0
      %359 = vmatpush.bf16.msra.mxu0 0
      %360 = vmatpush.bf16.msra.mxu0 0
      %361 = vmatpush.bf16.msra.mxu0 0
      %362 = vmatpush.bf16.msra.mxu0 0
      %363 = vmatpush.bf16.msra.mxu0 %v352
      %364 = vmatpush.bf16.msra.mxu0 %v295
      %365 = vmatmul.bf16.gmra.mxu0 %v303
      %v366 = vpop.f32.mrf.mxu0
      %v367 = vadd.f32 %v282, %v366
      %v368 = vpop.f32.mrf.mxu0
      %v369 = vadd.f32 %v282, %v368
      %370 = vmatmul.bf16.gmra.mxu0 %v306
      %v371 = vpop.f32.mrf.mxu0
      %v372 = vadd.f32 %v282, %v371
      %v373 = vpop.f32.mrf.mxu0
      %v374 = vadd.f32 %v282, %v373
      %375 = vmatmul.bf16.gmra.mxu0 %v309
      %v376 = vpop.f32.mrf.mxu0
      %v377 = vadd.f32 %v282, %v376
      %v378 = vpop.f32.mrf.mxu0
      %v379 = vadd.f32 %v282, %v378
      %380 = vmatmul.bf16.gmra.mxu0 %v312
      %v381 = vpop.f32.mrf.mxu0
      %v382 = vadd.f32 %v282, %v381
      %v383 = vpop.f32.mrf.mxu0
      %v384 = vadd.f32 %v282, %v383
      %385 = vmatmul.bf16.gmra.mxu0 %v315
      %v386 = vpop.f32.mrf.mxu0
      %v387 = vadd.f32 %v282, %v386
      %v388 = vpop.f32.mrf.mxu0
      %v389 = vadd.f32 %v282, %v388
      %390 = vmatmul.bf16.gmra.mxu0 %v318
      %v391 = vpop.f32.mrf.mxu0
      %v392 = vadd.f32 %v282, %v391
      %v393 = vpop.f32.mrf.mxu0
      %v394 = vadd.f32 %v282, %v393
      %395 = vmatmul.bf16.gmra.mxu0 %v321
      %v396 = vpop.f32.mrf.mxu0
      %v397 = vadd.f32 %v282, %v396
      %v398 = vpop.f32.mrf.mxu0
      %v399 = vadd.f32 %v282, %v398
      %400 = vmatmul.bf16.gmra.mxu0 %v324
      %v401 = vpop.f32.mrf.mxu0
      %v402 = vadd.f32 %v282, %v401
      %v403 = vpop.f32.mrf.mxu0
      %v404 = vadd.f32 %v282, %v403
      %405 = vmatmul.bf16.gmra.mxu0 %v327
      %v406 = vpop.f32.mrf.mxu0
      %v407 = vadd.f32 %v282, %v406
      %v408 = vpop.f32.mrf.mxu0
      %v409 = vadd.f32 %v282, %v408
      %410 = vmatmul.bf16.gmra.mxu0 %v330
      %v411 = vpop.f32.mrf.mxu0
      %v412 = vadd.f32 %v282, %v411
      %v413 = vpop.f32.mrf.mxu0
      %v414 = vadd.f32 %v282, %v413
      %415 = vmatmul.bf16.gmra.mxu0 %v333
      %v416 = vpop.f32.mrf.mxu0
      %v417 = vadd.f32 %v282, %v416
      %v418 = vpop.f32.mrf.mxu0
      %v419 = vadd.f32 %v282, %v418
      %420 = vmatmul.bf16.gmra.mxu0 %v336
      %v421 = vpop.f32.mrf.mxu0
      %v422 = vadd.f32 %v282, %v421
      %v423 = vpop.f32.mrf.mxu0
      %v424 = vadd.f32 %v282, %v423
      %425 = vmatmul.bf16.gmra.mxu0 %v339
      %v426 = vpop.f32.mrf.mxu0
      %v427 = vadd.f32 %v282, %v426
      %v428 = vpop.f32.mrf.mxu0
      %v429 = vadd.f32 %v282, %v428
      %430 = vmatmul.bf16.gmra.mxu0 %v342
      %v431 = vpop.f32.mrf.mxu0
      %v432 = vadd.f32 %v282, %v431
      %v433 = vpop.f32.mrf.mxu0
      %v434 = vadd.f32 %v282, %v433
      %435 = vmatmul.bf16.gmra.mxu0 %v345
      %v436 = vpop.f32.mrf.mxu0
      %v437 = vadd.f32 %v282, %v436
      %v438 = vpop.f32.mrf.mxu0
      %v439 = vadd.f32 %v282, %v438
      %440 = vmatmul.bf16.gmra.mxu0 %v348
      %v441 = vpop.f32.mrf.mxu0
      %v442 = vadd.f32 %v282, %v441
      %v443 = vpop.f32.mrf.mxu0
      %v444 = vadd.f32 %v282, %v443
      %445 = vdwg.mxu0
      %446 = vmatpush.bf16.msra.mxu0 0
      %447 = vmatpush.bf16.msra.mxu0 0
      %448 = vmatpush.bf16.msra.mxu0 0
      %449 = vmatpush.bf16.msra.mxu0 0
      %450 = vmatpush.bf16.msra.mxu0 0
      %451 = vmatpush.bf16.msra.mxu0 0
      %452 = vmatpush.bf16.msra.mxu0 %v355
      %453 = vmatpush.bf16.msra.mxu0 %v296
      %454 = vmatmul.bf16.gmra.mxu0 %v303
      %v455 = vpop.f32.mrf.mxu0
      %v456 = vadd.f32 %v283, %v455
      %v457 = vpop.f32.mrf.mxu0
      %v458 = vadd.f32 %v283, %v457
      %459 = vmatmul.bf16.gmra.mxu0 %v306
      %v460 = vpop.f32.mrf.mxu0
      %v461 = vadd.f32 %v283, %v460
      %v462 = vpop.f32.mrf.mxu0
      %v463 = vadd.f32 %v283, %v462
      %464 = vmatmul.bf16.gmra.mxu0 %v309
      %v465 = vpop.f32.mrf.mxu0
      %v466 = vadd.f32 %v283, %v465
      %v467 = vpop.f32.mrf.mxu0
      %v468 = vadd.f32 %v283, %v467
      %469 = vmatmul.bf16.gmra.mxu0 %v312
      %v470 = vpop.f32.mrf.mxu0
      %v471 = vadd.f32 %v283, %v470
      %v472 = vpop.f32.mrf.mxu0
      %v473 = vadd.f32 %v283, %v472
      %474 = vmatmul.bf16.gmra.mxu0 %v315
      %v475 = vpop.f32.mrf.mxu0
      %v476 = vadd.f32 %v283, %v475
      %v477 = vpop.f32.mrf.mxu0
      %v478 = vadd.f32 %v283, %v477
      %479 = vmatmul.bf16.gmra.mxu0 %v318
      %v480 = vpop.f32.mrf.mxu0
      %v481 = vadd.f32 %v283, %v480
      %v482 = vpop.f32.mrf.mxu0
      %v483 = vadd.f32 %v283, %v482
      %484 = vmatmul.bf16.gmra.mxu0 %v321
      %v485 = vpop.f32.mrf.mxu0
      %v486 = vadd.f32 %v283, %v485
      %v487 = vpop.f32.mrf.mxu0
      %v488 = vadd.f32 %v283, %v487
      %489 = vmatmul.bf16.gmra.mxu0 %v324
      %v490 = vpop.f32.mrf.mxu0
      %v491 = vadd.f32 %v283, %v490
      %v492 = vpop.f32.mrf.mxu0
      %v493 = vadd.f32 %v283, %v492
      %494 = vmatmul.bf16.gmra.mxu0 %v327
      %v495 = vpop.f32.mrf.mxu0
      %v496 = vadd.f32 %v283, %v495
      %v497 = vpop.f32.mrf.mxu0
      %v498 = vadd.f32 %v283, %v497
      %499 = vmatmul.bf16.gmra.mxu0 %v330
      %v500 = vpop.f32.mrf.mxu0
      %v501 = vadd.f32 %v283, %v500
      %v502 = vpop.f32.mrf.mxu0
      %v503 = vadd.f32 %v283, %v502
      %504 = vmatmul.bf16.gmra.mxu0 %v333
      %v505 = vpop.f32.mrf.mxu0
      %v506 = vadd.f32 %v283, %v505
      %v507 = vpop.f32.mrf.mxu0
      %v508 = vadd.f32 %v283, %v507
      %509 = vmatmul.bf16.gmra.mxu0 %v336
      %v510 = vpop.f32.mrf.mxu0
      %v511 = vadd.f32 %v283, %v510
      %v512 = vpop.f32.mrf.mxu0
      %v513 = vadd.f32 %v283, %v512
      %514 = vmatmul.bf16.gmra.mxu0 %v339
      %v515 = vpop.f32.mrf.mxu0
      %v516 = vadd.f32 %v283, %v515
      %v517 = vpop.f32.mrf.mxu0
      %v518 = vadd.f32 %v283, %v517
      %519 = vmatmul.bf16.gmra.mxu0 %v342
      %v520 = vpop.f32.mrf.mxu0
      %v521 = vadd.f32 %v283, %v520
      %v522 = vpop.f32.mrf.mxu0
      %v523 = vadd.f32 %v283, %v522
      %524 = vmatmul.bf16.gmra.mxu0 %v345
      %v525 = vpop.f32.mrf.mxu0
      %v526 = vadd.f32 %v283, %v525
      %v527 = vpop.f32.mrf.mxu0
      %v528 = vadd.f32 %v283, %v527
      %529 = vmatmul.bf16.gmra.mxu0 %v348
      %v530 = vpop.f32.mrf.mxu0
      %v531 = vadd.f32 %v283, %v530
      %v532 = vpop.f32.mrf.mxu0
      %v533 = vadd.f32 %v283, %v532
      %534 = vdwg.mxu0
      %v535 = vmax.f32 %v367, 0.0
      %v536 = vmax.f32 %v456, 0.0
      %v537 = vmax.f32 %v369, 0.0
      %v538 = vmax.f32 %v458, 0.0
      %v539 = vmax.f32 %v372, 0.0
      %v540 = vmax.f32 %v461, 0.0
      %v541 = vmax.f32 %v374, 0.0
      %v542 = vmax.f32 %v463, 0.0
      %v543 = vmax.f32 %v377, 0.0
      %v544 = vmax.f32 %v466, 0.0
      %v545 = vmax.f32 %v379, 0.0
      %v546 = vmax.f32 %v468, 0.0
      %v547 = vmax.f32 %v382, 0.0
      %v548 = vmax.f32 %v471, 0.0
      %v549 = vmax.f32 %v384, 0.0
      %v550 = vmax.f32 %v473, 0.0
      %v551 = vmax.f32 %v387, 0.0
      %v552 = vmax.f32 %v476, 0.0
      %v553 = vmax.f32 %v389, 0.0
      %v554 = vmax.f32 %v478, 0.0
      %v555 = vmax.f32 %v392, 0.0
      %v556 = vmax.f32 %v481, 0.0
      %v557 = vmax.f32 %v394, 0.0
      %v558 = vmax.f32 %v483, 0.0
      %v559 = vmax.f32 %v397, 0.0
      %v560 = vmax.f32 %v486, 0.0
      %v561 = vmax.f32 %v399, 0.0
      %v562 = vmax.f32 %v488, 0.0
      %v563 = vmax.f32 %v402, 0.0
      %v564 = vmax.f32 %v491, 0.0
      %v565 = vmax.f32 %v404, 0.0
      %v566 = vmax.f32 %v493, 0.0
      %v567 = vmax.f32 %v407, 0.0
      %v568 = vmax.f32 %v496, 0.0
      %v569 = vmax.f32 %v409, 0.0
      %v570 = vmax.f32 %v498, 0.0
      %v571 = vmax.f32 %v412, 0.0
      %v572 = vmax.f32 %v501, 0.0
      %v573 = vmax.f32 %v414, 0.0
      %v574 = vmax.f32 %v503, 0.0
      %v575 = vmax.f32 %v417, 0.0
      %v576 = vmax.f32 %v506, 0.0
      %v577 = vmax.f32 %v419, 0.0
      %v578 = vmax.f32 %v508, 0.0
      %v579 = vmax.f32 %v422, 0.0
      %v580 = vmax.f32 %v511, 0.0
      %v581 = vmax.f32 %v424, 0.0
      %v582 = vmax.f32 %v513, 0.0
      %v583 = vmax.f32 %v427, 0.0
      %v584 = vmax.f32 %v516, 0.0
      %v585 = vmax.f32 %v429, 0.0
      %v586 = vmax.f32 %v518, 0.0
      %v587 = vmax.f32 %v432, 0.0
      %v588 = vmax.f32 %v521, 0.0
      %v589 = vmax.f32 %v434, 0.0
      %v590 = vmax.f32 %v523, 0.0
      %v591 = vmax.f32 %v437, 0.0
      %v592 = vmax.f32 %v526, 0.0
      %v593 = vmax.f32 %v439, 0.0
      %v594 = vmax.f32 %v528, 0.0
      %v595 = vmax.f32 %v442, 0.0
      %v596 = vmax.f32 %v531, 0.0
      %v597 = vmax.f32 %v444, 0.0
      %v598 = vmax.f32 %v533, 0.0
      %v599 = vpack.c.bf16 %v537, %v535
      %v600 = vpack.c.bf16 %v538, %v536
      %v601 = vpack.c.bf16 %v541, %v539
      %v602 = vpack.c.bf16 %v542, %v540
      %v603 = vpack.c.bf16 %v545, %v543
      %v604 = vpack.c.bf16 %v546, %v544
      %v605 = vpack.c.bf16 %v549, %v547
      %v606 = vpack.c.bf16 %v550, %v548
      %v607 = vpack.c.bf16 %v553, %v551
      %v608 = vpack.c.bf16 %v554, %v552
      %v609 = vpack.c.bf16 %v557, %v555
      %v610 = vpack.c.bf16 %v558, %v556
      %v611 = vpack.c.bf16 %v561, %v559
      %v612 = vpack.c.bf16 %v562, %v560
      %v613 = vpack.c.bf16 %v565, %v563
      %v614 = vpack.c.bf16 %v566, %v564
      %v615 = vpack.c.bf16 %v569, %v567
      %v616 = vpack.c.bf16 %v570, %v568
      %v617 = vpack.c.bf16 %v573, %v571
      %v618 = vpack.c.bf16 %v574, %v572
      %v619 = vpack.c.bf16 %v577, %v575
      %v620 = vpack.c.bf16 %v578, %v576
      %v621 = vpack.c.bf16 %v581, %v579
      %v622 = vpack.c.bf16 %v582, %v580
      %v623 = vpack.c.bf16 %v585, %v583
      %v624 = vpack.c.bf16 %v586, %v584
      %v625 = vpack.c.bf16 %v589, %v587
      %v626 = vpack.c.bf16 %v590, %v588
      %v627 = vpack.c.bf16 %v593, %v591
      %v628 = vpack.c.bf16 %v594, %v592
      %v629 = vpack.c.bf16 %v597, %v595
      %v630 = vpack.c.bf16 %v598, %v596
      %v631 = vld [vmem:[%s3] sm:$0xf]
      %v632 = vld [vmem:[%s3 + $0x4] sm:$0xf]
      %v633 = vld [vmem:[%s3 + $0x8] sm:$0xf]
      %v634 = vld [vmem:[%s3 + $0xc] sm:$0xf]
      %v635 = vld [vmem:[%s3 + $0x10] sm:$0xf]
      %v636 = vld [vmem:[%s3 + $0x14] sm:$0xf]
      %v637 = vld [vmem:[%s3 + $0x18] sm:$0xf]
      %v638 = vld [vmem:[%s3 + $0x1c] sm:$0xf]
      %v639 = vld [vmem:[%s3 + $0x20] sm:$0xf]
      %v640 = vld [vmem:[%s3 + $0x24] sm:$0xf]
      %v641 = vld [vmem:[%s3 + $0x28] sm:$0xf]
      %v642 = vld [vmem:[%s3 + $0x2c] sm:$0xf]
      %v643 = vld [vmem:[%s3 + $0x30] sm:$0xf]
      %v644 = vld [vmem:[%s3 + $0x34] sm:$0xf]
      %v645 = vld [vmem:[%s3 + $0x38] sm:$0xf]
      %v646 = vld [vmem:[%s3 + $0x3c] sm:$0xf]
      %v647 = vld [vmem:[%s3 + $0x40] sm:$0xf]
      %v648 = vld [vmem:[%s3 + $0x44] sm:$0xf]
      %v649 = vld [vmem:[%s3 + $0x48] sm:$0xf]
      %v650 = vld [vmem:[%s3 + $0x4c] sm:$0xf]
      %v651 = vld [vmem:[%s3 + $0x50] sm:$0xf]
      %v652 = vld [vmem:[%s3 + $0x54] sm:$0xf]
      %v653 = vld [vmem:[%s3 + $0x58] sm:$0xf]
      %v654 = vld [vmem:[%s3 + $0x5c] sm:$0xf]
      %v655 = vld [vmem:[%s3 + $0x60] sm:$0xf]
      %v656 = vld [vmem:[%s3 + $0x64] sm:$0xf]
      %v657 = vld [vmem:[%s3 + $0x68] sm:$0xf]
      %v658 = vld [vmem:[%s3 + $0x6c] sm:$0xf]
      %v659 = vld [vmem:[%s3 + $0x70] sm:$0xf]
      %v660 = vld [vmem:[%s3 + $0x74] sm:$0xf]
      %v661 = vld [vmem:[%s3 + $0x78] sm:$0xf]
      %v662 = vld [vmem:[%s3 + $0x7c] sm:$0xf]
      %v663 = vld [vmem:[%s4] sm:$0x1]
      %v665 = vperm.slane %v663, 0
      %v699 = vunpack.c.l.b16 %v631
      %v700 = vunpack.c.l.b16 %v632
      %v701 = vunpack.c.l.b16 %v633
      %v702 = vunpack.c.l.b16 %v634
      %v703 = vunpack.c.l.b16 %v635
      %v704 = vunpack.c.l.b16 %v636
      %v705 = vunpack.c.l.b16 %v637
      %v706 = vunpack.c.l.b16 %v638
      %v707 = vunpack.c.l.b16 %v639
      %v708 = vunpack.c.l.b16 %v640
      %v709 = vunpack.c.l.b16 %v641
      %v710 = vunpack.c.l.b16 %v642
      %v711 = vunpack.c.l.b16 %v643
      %v712 = vunpack.c.l.b16 %v644
      %v713 = vunpack.c.l.b16 %v645
      %v714 = vunpack.c.l.b16 %v646
      %v715 = vunpack.c.l.b16 %v647
      %v716 = vunpack.c.l.b16 %v648
      %v717 = vunpack.c.l.b16 %v649
      %v718 = vunpack.c.l.b16 %v650
      %v719 = vunpack.c.l.b16 %v651
      %v720 = vunpack.c.l.b16 %v652
      %v721 = vunpack.c.l.b16 %v653
      %v722 = vunpack.c.l.b16 %v654
      %v723 = vunpack.c.l.b16 %v655
      %v724 = vunpack.c.l.b16 %v656
      %v725 = vunpack.c.l.b16 %v657
      %v726 = vunpack.c.l.b16 %v658
      %v727 = vunpack.c.l.b16 %v659
      %v728 = vunpack.c.l.b16 %v660
      %v729 = vunpack.c.l.b16 %v661
      %v730 = vunpack.c.l.b16 %v662
      %v731 = vpack.c.b16 %v700, %v699
      %v732 = vpack.c.b16 %v702, %v701
      %v733 = vpack.c.b16 %v704, %v703
      %v734 = vpack.c.b16 %v706, %v705
      %v735 = vpack.c.b16 %v708, %v707
      %v736 = vpack.c.b16 %v710, %v709
      %v737 = vpack.c.b16 %v712, %v711
      %v738 = vpack.c.b16 %v714, %v713
      %v739 = vpack.c.b16 %v716, %v715
      %v740 = vpack.c.b16 %v718, %v717
      %v741 = vpack.c.b16 %v720, %v719
      %v742 = vpack.c.b16 %v722, %v721
      %v743 = vpack.c.b16 %v724, %v723
      %v744 = vpack.c.b16 %v726, %v725
      %v745 = vpack.c.b16 %v728, %v727
      %v746 = vpack.c.b16 %v730, %v729
      %763 = vmatpush.bf16.msra.mxu0 %v738
      %764 = vmatpush.bf16.msra.mxu0 %v737
      %765 = vmatpush.bf16.msra.mxu0 %v736
      %766 = vmatpush.bf16.msra.mxu0 %v735
      %767 = vmatpush.bf16.msra.mxu0 %v734
      %768 = vmatpush.bf16.msra.mxu0 %v733
      %769 = vmatpush.bf16.msra.mxu0 %v732
      %770 = vmatpush.bf16.msra.mxu0 %v731
      %771 = vmatmul.bf16.gmra.mxu0 %v599
      %v772 = vpop.f32.mrf.mxu0
      %v773 = vadd.f32 %v665, %v772
      %v774 = vpop.f32.mrf.mxu0
      %v775 = vadd.f32 %v665, %v774
      %776 = vmatmul.bf16.gmra.mxu0 %v601
      %v777 = vpop.f32.mrf.mxu0
      %v778 = vadd.f32 %v665, %v777
      %v779 = vpop.f32.mrf.mxu0
      %v780 = vadd.f32 %v665, %v779
      %781 = vmatmul.bf16.gmra.mxu0 %v603
      %v782 = vpop.f32.mrf.mxu0
      %v783 = vadd.f32 %v665, %v782
      %v784 = vpop.f32.mrf.mxu0
      %v785 = vadd.f32 %v665, %v784
      %786 = vmatmul.bf16.gmra.mxu0 %v605
      %v787 = vpop.f32.mrf.mxu0
      %v788 = vadd.f32 %v665, %v787
      %v789 = vpop.f32.mrf.mxu0
      %v790 = vadd.f32 %v665, %v789
      %791 = vmatmul.bf16.gmra.mxu0 %v607
      %v792 = vpop.f32.mrf.mxu0
      %v793 = vadd.f32 %v665, %v792
      %v794 = vpop.f32.mrf.mxu0
      %v795 = vadd.f32 %v665, %v794
      %796 = vmatmul.bf16.gmra.mxu0 %v609
      %v797 = vpop.f32.mrf.mxu0
      %v798 = vadd.f32 %v665, %v797
      %v799 = vpop.f32.mrf.mxu0
      %v800 = vadd.f32 %v665, %v799
      %801 = vmatmul.bf16.gmra.mxu0 %v611
      %v802 = vpop.f32.mrf.mxu0
      %v803 = vadd.f32 %v665, %v802
      %v804 = vpop.f32.mrf.mxu0
      %v805 = vadd.f32 %v665, %v804
      %806 = vmatmul.bf16.gmra.mxu0 %v613
      %v807 = vpop.f32.mrf.mxu0
      %v808 = vadd.f32 %v665, %v807
      %v809 = vpop.f32.mrf.mxu0
      %v810 = vadd.f32 %v665, %v809
      %811 = vmatmul.bf16.gmra.mxu0 %v615
      %v812 = vpop.f32.mrf.mxu0
      %v813 = vadd.f32 %v665, %v812
      %v814 = vpop.f32.mrf.mxu0
      %v815 = vadd.f32 %v665, %v814
      %816 = vmatmul.bf16.gmra.mxu0 %v617
      %v817 = vpop.f32.mrf.mxu0
      %v818 = vadd.f32 %v665, %v817
      %v819 = vpop.f32.mrf.mxu0
      %v820 = vadd.f32 %v665, %v819
      %821 = vmatmul.bf16.gmra.mxu0 %v619
      %v822 = vpop.f32.mrf.mxu0
      %v823 = vadd.f32 %v665, %v822
      %v824 = vpop.f32.mrf.mxu0
      %v825 = vadd.f32 %v665, %v824
      %826 = vmatmul.bf16.gmra.mxu0 %v621
      %v827 = vpop.f32.mrf.mxu0
      %v828 = vadd.f32 %v665, %v827
      %v829 = vpop.f32.mrf.mxu0
      %v830 = vadd.f32 %v665, %v829
      %831 = vmatmul.bf16.gmra.mxu0 %v623
      %v832 = vpop.f32.mrf.mxu0
      %v833 = vadd.f32 %v665, %v832
      %v834 = vpop.f32.mrf.mxu0
      %v835 = vadd.f32 %v665, %v834
      %836 = vmatmul.bf16.gmra.mxu0 %v625
      %v837 = vpop.f32.mrf.mxu0
      %v838 = vadd.f32 %v665, %v837
      %v839 = vpop.f32.mrf.mxu0
      %v840 = vadd.f32 %v665, %v839
      %841 = vmatmul.bf16.gmra.mxu0 %v627
      %v842 = vpop.f32.mrf.mxu0
      %v843 = vadd.f32 %v665, %v842
      %v844 = vpop.f32.mrf.mxu0
      %v845 = vadd.f32 %v665, %v844
      %846 = vmatmul.bf16.gmra.mxu0 %v629
      %v847 = vpop.f32.mrf.mxu0
      %v848 = vadd.f32 %v665, %v847
      %v849 = vpop.f32.mrf.mxu0
      %v850 = vadd.f32 %v665, %v849
      %851 = vdwg.mxu0
      %852 = vmatpush.bf16.msra.mxu0 %v746
      %853 = vmatpush.bf16.msra.mxu0 %v745
      %854 = vmatpush.bf16.msra.mxu0 %v744
      %855 = vmatpush.bf16.msra.mxu0 %v743
      %856 = vmatpush.bf16.msra.mxu0 %v742
      %857 = vmatpush.bf16.msra.mxu0 %v741
      %858 = vmatpush.bf16.msra.mxu0 %v740
      %859 = vmatpush.bf16.msra.mxu0 %v739
      %860 = vmatmul.bf16.gmra.mxu0 %v600
      %v861 = vpop.f32.mrf.mxu0
      %v862 = vadd.f32 %v773, %v861
      %v863 = vpop.f32.mrf.mxu0
      %v864 = vadd.f32 %v775, %v863
      %865 = vmatmul.bf16.gmra.mxu0 %v602
      %v866 = vpop.f32.mrf.mxu0
      %v867 = vadd.f32 %v778, %v866
      %v868 = vpop.f32.mrf.mxu0
      %v869 = vadd.f32 %v780, %v868
      %870 = vmatmul.bf16.gmra.mxu0 %v604
      %v871 = vpop.f32.mrf.mxu0
      %v872 = vadd.f32 %v783, %v871
      %v873 = vpop.f32.mrf.mxu0
      %v874 = vadd.f32 %v785, %v873
      %875 = vmatmul.bf16.gmra.mxu0 %v606
      %v876 = vpop.f32.mrf.mxu0
      %v877 = vadd.f32 %v788, %v876
      %v878 = vpop.f32.mrf.mxu0
      %v879 = vadd.f32 %v790, %v878
      %880 = vmatmul.bf16.gmra.mxu0 %v608
      %v881 = vpop.f32.mrf.mxu0
      %v882 = vadd.f32 %v793, %v881
      %v883 = vpop.f32.mrf.mxu0
      %v884 = vadd.f32 %v795, %v883
      %885 = vmatmul.bf16.gmra.mxu0 %v610
      %v886 = vpop.f32.mrf.mxu0
      %v887 = vadd.f32 %v798, %v886
      %v888 = vpop.f32.mrf.mxu0
      %v889 = vadd.f32 %v800, %v888
      %890 = vmatmul.bf16.gmra.mxu0 %v612
      %v891 = vpop.f32.mrf.mxu0
      %v892 = vadd.f32 %v803, %v891
      %v893 = vpop.f32.mrf.mxu0
      %v894 = vadd.f32 %v805, %v893
      %895 = vmatmul.bf16.gmra.mxu0 %v614
      %v896 = vpop.f32.mrf.mxu0
      %v897 = vadd.f32 %v808, %v896
      %v898 = vpop.f32.mrf.mxu0
      %v899 = vadd.f32 %v810, %v898
      %900 = vmatmul.bf16.gmra.mxu0 %v616
      %v901 = vpop.f32.mrf.mxu0
      %v902 = vadd.f32 %v813, %v901
      %v903 = vpop.f32.mrf.mxu0
      %v904 = vadd.f32 %v815, %v903
      %905 = vmatmul.bf16.gmra.mxu0 %v618
      %v906 = vpop.f32.mrf.mxu0
      %v907 = vadd.f32 %v818, %v906
      %v908 = vpop.f32.mrf.mxu0
      %v909 = vadd.f32 %v820, %v908
      %910 = vmatmul.bf16.gmra.mxu0 %v620
      %v911 = vpop.f32.mrf.mxu0
      %v912 = vadd.f32 %v823, %v911
      %v913 = vpop.f32.mrf.mxu0
      %v914 = vadd.f32 %v825, %v913
      %915 = vmatmul.bf16.gmra.mxu0 %v622
      %v916 = vpop.f32.mrf.mxu0
      %v917 = vadd.f32 %v828, %v916
      %v918 = vpop.f32.mrf.mxu0
      %v919 = vadd.f32 %v830, %v918
      %920 = vmatmul.bf16.gmra.mxu0 %v624
      %v921 = vpop.f32.mrf.mxu0
      %v922 = vadd.f32 %v833, %v921
      %v923 = vpop.f32.mrf.mxu0
      %v924 = vadd.f32 %v835, %v923
      %925 = vmatmul.bf16.gmra.mxu0 %v626
      %v926 = vpop.f32.mrf.mxu0
      %v927 = vadd.f32 %v838, %v926
      %v928 = vpop.f32.mrf.mxu0
      %v929 = vadd.f32 %v840, %v928
      %930 = vmatmul.bf16.gmra.mxu0 %v628
      %v931 = vpop.f32.mrf.mxu0
      %v932 = vadd.f32 %v843, %v931
      %v933 = vpop.f32.mrf.mxu0
      %v934 = vadd.f32 %v845, %v933
      %935 = vmatmul.bf16.gmra.mxu0 %v630
      %v936 = vpop.f32.mrf.mxu0
      %v937 = vadd.f32 %v848, %v936
      %v938 = vpop.f32.mrf.mxu0
      %v939 = vadd.f32 %v850, %v938
      %940 = vdwg.mxu0
      %vm941 = vcmask 80896
      %942 = vst.msk [vmem:[%s226] sm:$0xff] %vm941, %v862
      %943 = vst.msk [vmem:[%s226 + $0x8] sm:$0xff] %vm941, %v864
      %944 = vst.msk [vmem:[%s226 + $0x10] sm:$0xff] %vm941, %v867
      %945 = vst.msk [vmem:[%s226 + $0x18] sm:$0xff] %vm941, %v869
      %946 = vst.msk [vmem:[%s226 + $0x20] sm:$0xff] %vm941, %v872
      %947 = vst.msk [vmem:[%s226 + $0x28] sm:$0xff] %vm941, %v874
      %948 = vst.msk [vmem:[%s226 + $0x30] sm:$0xff] %vm941, %v877
      %949 = vst.msk [vmem:[%s226 + $0x38] sm:$0xff] %vm941, %v879
      %950 = vst.msk [vmem:[%s226 + $0x40] sm:$0xff] %vm941, %v882
      %951 = vst.msk [vmem:[%s226 + $0x48] sm:$0xff] %vm941, %v884
      %952 = vst.msk [vmem:[%s226 + $0x50] sm:$0xff] %vm941, %v887
      %953 = vst.msk [vmem:[%s226 + $0x58] sm:$0xff] %vm941, %v889
      %954 = vst.msk [vmem:[%s226 + $0x60] sm:$0xff] %vm941, %v892
      %955 = vst.msk [vmem:[%s226 + $0x68] sm:$0xff] %vm941, %v894
      %956 = vst.msk [vmem:[%s226 + $0x70] sm:$0xff] %vm941, %v897
      %957 = vst.msk [vmem:[%s226 + $0x78] sm:$0xff] %vm941, %v899
      %958 = vst.msk [vmem:[%s226 + $0x80] sm:$0xff] %vm941, %v902
      %959 = vst.msk [vmem:[%s226 + $0x88] sm:$0xff] %vm941, %v904
      %960 = vst.msk [vmem:[%s226 + $0x90] sm:$0xff] %vm941, %v907
      %961 = vst.msk [vmem:[%s226 + $0x98] sm:$0xff] %vm941, %v909
      %962 = vst.msk [vmem:[%s226 + $0xa0] sm:$0xff] %vm941, %v912
      %963 = vst.msk [vmem:[%s226 + $0xa8] sm:$0xff] %vm941, %v914
      %964 = vst.msk [vmem:[%s226 + $0xb0] sm:$0xff] %vm941, %v917
      %965 = vst.msk [vmem:[%s226 + $0xb8] sm:$0xff] %vm941, %v919
      %966 = vst.msk [vmem:[%s226 + $0xc0] sm:$0xff] %vm941, %v922
      %967 = vst.msk [vmem:[%s226 + $0xc8] sm:$0xff] %vm941, %v924
      %968 = vst.msk [vmem:[%s226 + $0xd0] sm:$0xff] %vm941, %v927
      %969 = vst.msk [vmem:[%s226 + $0xd8] sm:$0xff] %vm941, %v929
      %970 = vst.msk [vmem:[%s226 + $0xe0] sm:$0xff] %vm941, %v932
      %971 = vst.msk [vmem:[%s226 + $0xe8] sm:$0xff] %vm941, %v934
      %972 = vst.msk [vmem:[%s226 + $0xf0] sm:$0xff] %vm941, %v937
      %973 = vst.msk [vmem:[%s226 + $0xf8] sm:$0xff] %vm941, %v939
      %s974 = smul.u32 32, %s16
      %p975 = scmp.lt.s32.totalorder %s974, 63
      %s976 = scalar_select %p975, %s974, 63
      %s977 = smul.addr %s976, 8
      %s978 = scalar_lea.vmem %s5, %s977
      // Predicated region
      $region41: #{mysequential_forward.1} parent=39 // pred_check
        %p979 = pneg %p144
      $region42: #{mysequential_forward.1} parent=39 // pred_check_branch
        %981 = sbr.rel (%p979) target = $region44
      $region43: #{mysequential_forward.1} parent=39 // pred_region
        %s982 = smul.u32 32, %s16
      $region44: #{mysequential_forward.1} parent=39 // pred_fallthru
        _
    $region40: #{mysequential_forward.1} parent=5 // pred_fallthru
      _
    %p983 = scmp.le.s32.totalorder 2, %s11
    // Predicated region
    $region45: #{mysequential_forward.1} parent=5 // pred_check
      %p984 = pneg %p983
    $region46: #{mysequential_forward.1} parent=5 // pred_check_branch
      %986 = sbr.rel (%p984) target = $region48
    $region47: #{mysequential_forward.1} parent=5 // pred_region
      %s987 = ssub.s32 %s11, 2
      // Predicated region
      $region49: #{mysequential_forward.1} parent=47 // pred_check
        %p988 = pneg %p150
      $region50: #{mysequential_forward.1} parent=47 // pred_check_branch
        %990 = sbr.rel (%p988) target = $region52
      $region51: #{mysequential_forward.1} parent=47 // pred_region
        %s991 = smul.u32 32, %s17
        %p992 = scmp.lt.s32.totalorder %s991, 63
        %s993 = scalar_select %p992, %s991, 63
        %s994 = smul.addr %s993, 8
        %s995 = scalar_lea.vmem %s5, %s994
      $region52: #{mysequential_forward.1} parent=47 // pred_fallthru
        _
    $region48: #{mysequential_forward.1} parent=5 // pred_fallthru
      _
  $region6: #{mysequential_forward.1} parent=0 // loop_footer
    %s15 = sadd.s32 1, %s11
  $region7: #{mysequential_forward.1} parent=0 // loop_footer_branch
    %10 = sbr.rel target = $region3
  $region8: #{mysequential_forward.1} parent=0 // loop_exit
    _

</llo_original>
